<compile_context>
chip_gen: v6e
topology: v6e:2x2x1
jax: 0.10.0
libtpu: 0.0.40
codegen_flags: <defaults>
</compile_context>

<pallas_src>
import jax
import jax.numpy as jnp
from jax import lax
from jax.experimental import pallas as pl
from jax.experimental.pallas import tpu as pltpu

EPS = 1e-12  # matches F.normalize default eps (clamp_min on the norm)


def _netvlad_kernel(x_ref, w_ref, b_ref, cent_ref, out_ref):
    # x_ref:    (Bb, C, N) native PyTorch-layout block (channels first)
    # w_ref:    (M, C)     conv1d 1x1 weight (native layout, no wrapper transpose)
    # b_ref:    (1, M)     conv1d bias
    # cent_ref: (M, C)     cluster centroids
    # out_ref:  (Bb, M, C) globally L2-normalized VLAD (flattened by wrapper)
    Bb, C, N = x_ref.shape
    M = cent_ref.shape[0]

    # ---- in-kernel layout swap: (Bb, C, N) -> (Bb*N, C) -------------------
    # 2-D minor transposes ride the XLU slot and are hidden under the DMA
    # pipeline; the row concat keeps C on lanes and Bb*N on sublanes.
    slabs = [x_ref[i].T for i in range(Bb)]                        # each (N, C)
    x = slabs[0] if Bb == 1 else jnp.concatenate(slabs, axis=0)    # (Bb*N, C)

    # 1) descriptor-wise L2 normalization over C (rsqrt -> EUP slot)
    sumsq = jnp.sum(x * x, axis=-1, keepdims=True)
    x = x * lax.rsqrt(jnp.maximum(sumsq, EPS * EPS))

    # 2) 1x1 conv as one fused MXU matmul over all Bb*N rows:
    #    (Bb*N, C) contracted with (M, C) over C  ->  (Bb*N, M)
    s = lax.dot_general(x, w_ref[...],
                        dimension_numbers=(((1,), (1,)), ((), ())),
                        preferred_element_type=jnp.float32) + b_ref[...]

    # 3) softmax over clusters M (exact reciprocal -> EUP path)
    s = s - jnp.max(s, axis=-1, keepdims=True)
    e = jnp.exp(s)
    a = e * pl.reciprocal(jnp.sum(e, axis=-1, keepdims=True), approx=False)
    # NOTE: torch.max(soft_assign, dim=1) in the reference produces an unused
    # `index`; it does not affect the output, so it is omitted.

    # 4+5) per batch element: residual contraction + the two normalizations.
    #      Bb is small, so this static unroll is cheap; no materialized a.T.
    cent = cent_ref[...]
    ones_col = jnp.ones((N, 1), dtype=jnp.float32)
    for i in range(Bb):
        a_i = a[i * N:(i + 1) * N, :]                              # (N, M)
        x_i = x[i * N:(i + 1) * N, :]                              # (N, C)

        # v[m, c] = sum_n a_i[n, m] * x_i[n, c]   (contract over N directly)
        v = lax.dot_general(a_i, x_i,
                            dimension_numbers=(((0,), (0,)), ((), ())),
                            preferred_element_type=jnp.float32)    # (M, C)
        # assignment mass per cluster, kept 2-D via a tiny MXU dot: (M, 1)
        a_sum = lax.dot_general(a_i, ones_col,
                                dimension_numbers=(((0,), (0,)), ((), ())),
                                preferred_element_type=jnp.float32)
        v = v - cent * a_sum

        # 5a) intra-cluster L2 normalization (over C)
        vsq = jnp.sum(v * v, axis=-1, keepdims=True)
        v = v * lax.rsqrt(jnp.maximum(vsq, EPS * EPS))

        # 5b) global L2 normalization of the flattened (M*C,) descriptor
        tot = jnp.sum(v * v)
        v = v * lax.rsqrt(jnp.maximum(tot, EPS * EPS))

        out_ref[i] = v


def _pick_block_batch(B, N, target_rows=512):
    """Fuse batch elements per grid step (rows = Bb*N) up to ~target_rows,
    while keeping >= 2 grid steps whenever B >= 2 (v7x has 2 TensorCores)."""
    best = 1
    for bb in range(1, B + 1):
        if B % bb != 0:
            continue
        if bb * N > max(target_rows, N):
            continue
        if B >= 2 and (B // bb) < 2:
            continue
        best = bb
    return best


def netvlad_forward(x_bcn, w_mc, bias_m, centroids_mc, *, block_batch=None):
    """x_bcn: (B, C, N) float32 — same layout as the PyTorch module."""
    B, C, N = x_bcn.shape
    M = w_mc.shape[0]
    bb = _pick_block_batch(B, N) if block_batch is None else block_batch
    assert B % bb == 0, "block_batch must divide B"

    x = x_bcn.astype(jnp.float32)                     # no wrapper transpose of x
    w = w_mc.astype(jnp.float32)                      # (M, C), native layout
    b_1m = bias_m.reshape(1, M).astype(jnp.float32)   # (1, M)
    cent = centroids_mc.astype(jnp.float32)           # (M, C)

    # Scoped-VMEM budget sized from the actual block footprint (double-buffered
    # input + output + resident params); only raised above default when needed.
    block_bytes = bb * C * N * 4
    out_bytes = bb * M * C * 4
    param_bytes = (2 * M * C + M) * 4
    vmem_limit = max(32 * 1024 * 1024,
                     3 * block_bytes + 2 * out_bytes + param_bytes + (1 << 20))

    out_bmc = pl.pallas_call(
        _netvlad_kernel,
        out_shape=jax.ShapeDtypeStruct((B, M, C), jnp.float32),
        grid_spec=pltpu.PrefetchScalarGridSpec(
            num_scalar_prefetch=0,
            grid=(B // bb,),
            in_specs=[
                pl.BlockSpec((bb, C, N), lambda i: (i, 0, 0)),
                pl.BlockSpec((M, C), lambda i: (0, 0)),
                pl.BlockSpec((1, M), lambda i: (0, 0)),
                pl.BlockSpec((M, C), lambda i: (0, 0)),
            ],
            out_specs=pl.BlockSpec((bb, M, C), lambda i: (i, 0, 0)),
        ),
        compiler_params=pltpu.CompilerParams(
            dimension_semantics=("parallel",),
            vmem_limit_bytes=vmem_limit),
    )(x, w, b_1m, cent)

    # flatten (glue): (B, M, C) -> (B, M*C). Kept outside the kernel: merging
    # M into lanes at C=64 < 128 would force a cross-lane relayout in-kernel.
    return out_bmc.reshape(B, M * C)


def netvlad_reference(x, w, bias, centroids):
    """Plain-JAX replica of the PyTorch forward, for validation."""
    xn = x / jnp.maximum(jnp.sqrt(jnp.sum(x * x, axis=1, keepdims=True)), EPS)
    s = jnp.einsum("mc,bcn->bmn", w, xn) + bias[None, :, None]
    a = jax.nn.softmax(s, axis=1)
    v = jnp.einsum("bmn,bcn->bmc", a, xn) \
        - centroids[None] * jnp.sum(a, axis=-1)[..., None]
    v = v / jnp.maximum(jnp.sqrt(jnp.sum(v * v, axis=-1, keepdims=True)), EPS)
    flat = v.reshape(v.shape[0], -1)
    return flat / jnp.maximum(
        jnp.sqrt(jnp.sum(flat * flat, axis=-1, keepdims=True)), EPS)


if __name__ == "__main__":
    # Module defaults: num_clusters=13, input_feat_size=64
    M, C = 13, 64
    # B=4, N=16: exercises batch fusion (Bb=2 -> 32 fused rows per step) while
    # keeping 2 "parallel" grid steps (v7x megacore).
    B, N = 4, 16

    key = jax.random.PRNGKey(0)
    k_x, k_w, k_b, k_c = jax.random.split(key, 4)

    # Deterministic parameter init mirroring _init_params():
    #   conv.weight (M, C, 1) ~ N(0, 1/sqrt(C)); conv.bias (M,) ~ N(0, 1/sqrt(C))
    #   centroids   (M, C)    ~ U[0, 1)
    scale = 1.0 / jnp.sqrt(jnp.float32(C))
    w_mc = jax.random.normal(k_w, (M, C), dtype=jnp.float32) * scale
    bias_m = jax.random.normal(k_b, (M,), dtype=jnp.float32) * scale
    centroids = jax.random.uniform(k_c, (M, C), dtype=jnp.float32)

    x = jax.random.normal(k_x, (B, C, N), dtype=jnp.float32)

    out = netvlad_forward(x, w_mc, bias_m, centroids)
    jax.block_until_ready(out)

    ref = netvlad_reference(x, w_mc, bias_m, centroids)
    assert out.shape == (B, M * C)
    assert jnp.allclose(out, ref, atol=2e-5, rtol=1e-5), "mismatch vs reference"

    print("KERNEL_OK")
</pallas_src>

<mosaic_0001>
module attributes {stable_mosaic.version = 11 : i64} {
  func.func @_netvlad_kernel(%arg0: i32, %arg1: memref<2x64x16xf32, #tpu.memory_space<vmem>>, %arg2: memref<13x64xf32, #tpu.memory_space<vmem>>, %arg3: memref<1x13xf32, #tpu.memory_space<vmem>>, %arg4: memref<13x64xf32, #tpu.memory_space<vmem>>, %arg5: memref<2x13x64xf32, #tpu.memory_space<vmem>>) attributes {dimension_semantics = [#tpu.dimension_semantics<parallel>], iteration_bounds = array<i64: 2>, scalar_prefetch = 0 : i64, scratch_operands = 0 : i64, tpu.core_type = #tpu.core_type<tc>, window_params = [{transform_indices = @transform_0, window_bounds = array<i64: 2, 64, 16>}, {pipeline_mode = #tpu.pipeline_mode<synchronous>, transform_indices = @transform_1, window_bounds = array<i64: 13, 64>}, {pipeline_mode = #tpu.pipeline_mode<synchronous>, transform_indices = @transform_2, window_bounds = array<i64: 1, 13>}, {pipeline_mode = #tpu.pipeline_mode<synchronous>, transform_indices = @transform_3, window_bounds = array<i64: 13, 64>}, {transform_indices = @transform_4, window_bounds = array<i64: 2, 13, 64>}]} {
    %c0 = arith.constant 0 : index
    %c0_0 = arith.constant 0 : index
    %c0_1 = arith.constant 0 : index
    %0 = vector.load %arg1[%c0, %c0_0, %c0_1] : memref<2x64x16xf32, #tpu.memory_space<vmem>>, vector<1x64x16xf32>
    %1 = vector.shape_cast %0 : vector<1x64x16xf32> to vector<64x16xf32>
    %2 = tpu.transpose %1, [1, 0] : vector<64x16xf32> -> vector<16x64xf32>
    %c1 = arith.constant 1 : index
    %c0_2 = arith.constant 0 : index
    %c0_3 = arith.constant 0 : index
    %3 = vector.load %arg1[%c1, %c0_2, %c0_3] : memref<2x64x16xf32, #tpu.memory_space<vmem>>, vector<1x64x16xf32>
    %4 = vector.shape_cast %3 : vector<1x64x16xf32> to vector<64x16xf32>
    %5 = tpu.transpose %4, [1, 0] : vector<64x16xf32> -> vector<16x64xf32>
    %6 = tpu.concatenate %2, %5 in 0 : vector<16x64xf32>, vector<16x64xf32> -> vector<32x64xf32>
    %7 = arith.mulf %6, %6 : vector<32x64xf32>
    %cst = arith.constant dense<0.000000e+00> : vector<32xf32>
    %8 = vector.multi_reduction <add>, %7, %cst [1] : vector<32x64xf32> to vector<32xf32>
    %9 = vector.shape_cast %8 : vector<32xf32> to vector<32x1xf32>
    %cst_4 = arith.constant 1.000000e-24 : f32
    %10 = vector.broadcast %cst_4 : f32 to vector<32x1xf32>
    %11 = arith.maximumf %9, %10 : vector<32x1xf32>
    %12 = math.rsqrt %11 : vector<32x1xf32>
    %13 = vector.broadcast %12 : vector<32x1xf32> to vector<32x64xf32>
    %14 = arith.mulf %6, %13 : vector<32x64xf32>
    %c0_5 = arith.constant 0 : index
    %c0_6 = arith.constant 0 : index
    %15 = vector.load %arg2[%c0_5, %c0_6] : memref<13x64xf32, #tpu.memory_space<vmem>>, vector<13x64xf32>
    %cst_7 = arith.constant dense<0.000000e+00> : vector<32x13xf32>
    %16 = tpu.matmul %14, %15, %cst_7 {dimension_numbers = #tpu.dot_dimension_numbers<[1], [1], [0], [0], [0, 0, 1, 0], [], []>} : vector<32x64xf32>, vector<13x64xf32>, vector<32x13xf32> -> vector<32x13xf32>
    %c0_8 = arith.constant 0 : index
    %c0_9 = arith.constant 0 : index
    %17 = vector.load %arg3[%c0_8, %c0_9] : memref<1x13xf32, #tpu.memory_space<vmem>>, vector<1x13xf32>
    %18 = vector.broadcast %17 : vector<1x13xf32> to vector<32x13xf32>
    %19 = arith.addf %16, %18 : vector<32x13xf32>
    %cst_10 = arith.constant dense<0xFF800000> : vector<32xf32>
    %20 = vector.multi_reduction <maximumf>, %19, %cst_10 [1] : vector<32x13xf32> to vector<32xf32>
    %21 = vector.shape_cast %20 : vector<32xf32> to vector<32x1xf32>
    %22 = vector.broadcast %21 : vector<32x1xf32> to vector<32x13xf32>
    %23 = arith.subf %19, %22 : vector<32x13xf32>
    %24 = math.exp %23 : vector<32x13xf32>
    %cst_11 = arith.constant dense<0.000000e+00> : vector<32xf32>
    %25 = vector.multi_reduction <add>, %24, %cst_11 [1] : vector<32x13xf32> to vector<32xf32>
    %26 = vector.shape_cast %25 : vector<32xf32> to vector<32x1xf32>
    %27 = tpu.reciprocal %26 : vector<32x1xf32> -> vector<32x1xf32>
    %28 = vector.broadcast %27 : vector<32x1xf32> to vector<32x13xf32>
    %29 = arith.mulf %24, %28 : vector<32x13xf32>
    %c0_12 = arith.constant 0 : index
    %c0_13 = arith.constant 0 : index
    %30 = vector.load %arg4[%c0_12, %c0_13] : memref<13x64xf32, #tpu.memory_space<vmem>>, vector<13x64xf32>
    %cst_14 = arith.constant 1.000000e+00 : f32
    %31 = vector.broadcast %cst_14 : f32 to vector<16x1xf32>
    %32 = vector.extract_strided_slice %29 {offsets = [0, 0], sizes = [16, 13], strides = [1, 1]} : vector<32x13xf32> to vector<16x13xf32>
    %33 = vector.extract_strided_slice %14 {offsets = [0, 0], sizes = [16, 64], strides = [1, 1]} : vector<32x64xf32> to vector<16x64xf32>
    %cst_15 = arith.constant dense<0.000000e+00> : vector<13x64xf32>
    %34 = tpu.matmul %32, %33, %cst_15 {dimension_numbers = #tpu.dot_dimension_numbers<[0], [0], [1], [1], [0, 1, 1, 1], [], []>} : vector<16x13xf32>, vector<16x64xf32>, vector<13x64xf32> -> vector<13x64xf32>
    %cst_16 = arith.constant dense<0.000000e+00> : vector<13x1xf32>
    %35 = tpu.matmul %32, %31, %cst_16 {dimension_numbers = #tpu.dot_dimension_numbers<[0], [0], [1], [1], [0, 1, 1, 1], [], []>} : vector<16x13xf32>, vector<16x1xf32>, vector<13x1xf32> -> vector<13x1xf32>
    %36 = vector.broadcast %35 : vector<13x1xf32> to vector<13x64xf32>
    %37 = arith.mulf %30, %36 : vector<13x64xf32>
    %38 = arith.subf %34, %37 : vector<13x64xf32>
    %39 = arith.mulf %38, %38 : vector<13x64xf32>
    %cst_17 = arith.constant dense<0.000000e+00> : vector<13xf32>
    %40 = vector.multi_reduction <add>, %39, %cst_17 [1] : vector<13x64xf32> to vector<13xf32>
    %41 = vector.shape_cast %40 : vector<13xf32> to vector<13x1xf32>
    %cst_18 = arith.constant 1.000000e-24 : f32
    %42 = vector.broadcast %cst_18 : f32 to vector<13x1xf32>
    %43 = arith.maximumf %41, %42 : vector<13x1xf32>
    %44 = math.rsqrt %43 : vector<13x1xf32>
    %45 = vector.broadcast %44 : vector<13x1xf32> to vector<13x64xf32>
    %46 = arith.mulf %38, %45 : vector<13x64xf32>
    %47 = arith.mulf %46, %46 : vector<13x64xf32>
    %48 = vector.shape_cast %47 : vector<13x64xf32> to vector<1x13x64xf32>
    %cst_19 = arith.constant dense<0.000000e+00> : vector<1xf32>
    %49 = vector.multi_reduction <add>, %48, %cst_19 [1, 2] : vector<1x13x64xf32> to vector<1xf32>
    %50 = vector.shape_cast %49 : vector<1xf32> to vector<1x1x1xf32>
    %51 = vector.extract %50[0, 0, 0] : f32 from vector<1x1x1xf32>
    %cst_20 = arith.constant 1.000000e-24 : f32
    %52 = arith.maximumf %51, %cst_20 : f32
    %53 = math.rsqrt %52 : f32
    %54 = vector.broadcast %53 : f32 to vector<13x64xf32>
    %55 = arith.mulf %46, %54 : vector<13x64xf32>
    %c0_21 = arith.constant 0 : index
    %c0_22 = arith.constant 0 : index
    %c0_23 = arith.constant 0 : index
    %56 = vector.load %arg5[%c0_21, %c0_22, %c0_23] : memref<2x13x64xf32, #tpu.memory_space<vmem>>, vector<1x13x64xf32>
    %57 = vector.shape_cast %56 : vector<1x13x64xf32> to vector<13x64xf32>
    %58 = vector.shape_cast %55 : vector<13x64xf32> to vector<1x13x64xf32>
    tpu.vector_store %arg5[%c0_21, %c0_22, %c0_23], %58 {strides = array<i32>} : memref<2x13x64xf32, #tpu.memory_space<vmem>>, vector<1x13x64xf32>,
    %59 = vector.extract_strided_slice %29 {offsets = [16, 0], sizes = [16, 13], strides = [1, 1]} : vector<32x13xf32> to vector<16x13xf32>
    %60 = vector.extract_strided_slice %14 {offsets = [16, 0], sizes = [16, 64], strides = [1, 1]} : vector<32x64xf32> to vector<16x64xf32>
    %cst_24 = arith.constant dense<0.000000e+00> : vector<13x64xf32>
    %61 = tpu.matmul %59, %60, %cst_24 {dimension_numbers = #tpu.dot_dimension_numbers<[0], [0], [1], [1], [0, 1, 1, 1], [], []>} : vector<16x13xf32>, vector<16x64xf32>, vector<13x64xf32> -> vector<13x64xf32>
    %cst_25 = arith.constant dense<0.000000e+00> : vector<13x1xf32>
    %62 = tpu.matmul %59, %31, %cst_25 {dimension_numbers = #tpu.dot_dimension_numbers<[0], [0], [1], [1], [0, 1, 1, 1], [], []>} : vector<16x13xf32>, vector<16x1xf32>, vector<13x1xf32> -> vector<13x1xf32>
    %63 = vector.broadcast %62 : vector<13x1xf32> to vector<13x64xf32>
    %64 = arith.mulf %30, %63 : vector<13x64xf32>
    %65 = arith.subf %61, %64 : vector<13x64xf32>
    %66 = arith.mulf %65, %65 : vector<13x64xf32>
    %cst_26 = arith.constant dense<0.000000e+00> : vector<13xf32>
    %67 = vector.multi_reduction <add>, %66, %cst_26 [1] : vector<13x64xf32> to vector<13xf32>
    %68 = vector.shape_cast %67 : vector<13xf32> to vector<13x1xf32>
    %cst_27 = arith.constant 1.000000e-24 : f32
    %69 = vector.broadcast %cst_27 : f32 to vector<13x1xf32>
    %70 = arith.maximumf %68, %69 : vector<13x1xf32>
    %71 = math.rsqrt %70 : vector<13x1xf32>
    %72 = vector.broadcast %71 : vector<13x1xf32> to vector<13x64xf32>
    %73 = arith.mulf %65, %72 : vector<13x64xf32>
    %74 = arith.mulf %73, %73 : vector<13x64xf32>
    %75 = vector.shape_cast %74 : vector<13x64xf32> to vector<1x13x64xf32>
    %cst_28 = arith.constant dense<0.000000e+00> : vector<1xf32>
    %76 = vector.multi_reduction <add>, %75, %cst_28 [1, 2] : vector<1x13x64xf32> to vector<1xf32>
    %77 = vector.shape_cast %76 : vector<1xf32> to vector<1x1x1xf32>
    %78 = vector.extract %77[0, 0, 0] : f32 from vector<1x1x1xf32>
    %cst_29 = arith.constant 1.000000e-24 : f32
    %79 = arith.maximumf %78, %cst_29 : f32
    %80 = math.rsqrt %79 : f32
    %81 = vector.broadcast %80 : f32 to vector<13x64xf32>
    %82 = arith.mulf %73, %81 : vector<13x64xf32>
    %c1_30 = arith.constant 1 : index
    %c0_31 = arith.constant 0 : index
    %c0_32 = arith.constant 0 : index
    %83 = vector.load %arg5[%c1_30, %c0_31, %c0_32] : memref<2x13x64xf32, #tpu.memory_space<vmem>>, vector<1x13x64xf32>
    %84 = vector.shape_cast %83 : vector<1x13x64xf32> to vector<13x64xf32>
    %85 = vector.shape_cast %82 : vector<13x64xf32> to vector<1x13x64xf32>
    tpu.vector_store %arg5[%c1_30, %c0_31, %c0_32], %85 {strides = array<i32>} : memref<2x13x64xf32, #tpu.memory_space<vmem>>, vector<1x13x64xf32>,
    return
  }
  func.func @transform_0(%arg0: i32) -> (i32, i32, i32) {
    %c0_i32 = arith.constant 0 : i32
    %c0_i32_0 = arith.constant 0 : i32
    %c0_i32_1 = arith.constant 0 : i32
    return %arg0, %c0_i32, %c0_i32_0 : i32, i32, i32
  }
  func.func @transform_1(%arg0: i32) -> (i32, i32) {
    %c0_i32 = arith.constant 0 : i32
    %c0_i32_0 = arith.constant 0 : i32
    %c0_i32_1 = arith.constant 0 : i32
    return %c0_i32, %c0_i32_0 : i32, i32
  }
  func.func @transform_2(%arg0: i32) -> (i32, i32) {
    %c0_i32 = arith.constant 0 : i32
    %c0_i32_0 = arith.constant 0 : i32
    %c0_i32_1 = arith.constant 0 : i32
    return %c0_i32, %c0_i32_0 : i32, i32
  }
  func.func @transform_3(%arg0: i32) -> (i32, i32) {
    %c0_i32 = arith.constant 0 : i32
    %c0_i32_0 = arith.constant 0 : i32
    %c0_i32_1 = arith.constant 0 : i32
    return %c0_i32, %c0_i32_0 : i32, i32
  }
  func.func @transform_4(%arg0: i32) -> (i32, i32, i32) {
    %c0_i32 = arith.constant 0 : i32
    %c0_i32_0 = arith.constant 0 : i32
    %c0_i32_1 = arith.constant 0 : i32
    return %arg0, %c0_i32, %c0_i32_0 : i32, i32, i32
  }
}

</mosaic_0001>

<llo_original>
// kernel: tpu_custom_call.1
$region0: #{tpu_custom_call.1}
  #allocation0 [shape = 'u32[]', space=smem, size = 0x4, offset = 0x4, fixed_abs, tag = 'smem constant byte address 0x4 - core index']
  #allocation1 [shape = 'u32[144,128]{1,0:T(1,128)}', space=vmem, size = 0x12000, scoped, tag = 'internal scratch']
  %s0 = inlined_call_operand.vmem [shape: f32[4,64,16], index: 0, kind: input, shape index: {}]
  %s1 = inlined_call_operand.vmem [shape: f32[13,64], index: 1, kind: input, shape index: {}]
  %s2 = inlined_call_operand.vmem [shape: f32[1,13], index: 2, kind: input, shape index: {}]
  %s3 = inlined_call_operand.vmem [shape: f32[13,64], index: 3, kind: input, shape index: {}]
  %s4 = inlined_call_operand.vmem [shape: f32[4,13,64], index: 4, kind: output, shape index: {}]
  %s5 = sld [smem:[#allocation0]]
  $region49: #{tpu_custom_call.1} parent=0
    _
  %s7 = ssub.s32 1, %s5
  %s8 = scalar_select 0, %s7, %s5
  loop: start=0, step=1, limit=4
  $region2: #{tpu_custom_call.1} parent=0 // loop_pre_header
    _
  $region3: #{tpu_custom_call.1} parent=0 // loop_header
    %s10 = sphi 0, %s14
    %p11 = scmp.ge.s32.totalorder %s10, 4
    %s20 = sphi 0, %s22
    %s23 = sphi 0, %s20
    %s24 = sphi 0, %s23
    %s40 = sphi 0, %s24
    %s44 = sphi 0, %s44
    %s46 = sphi 0, %s44
    %s47 = sphi 0, %s46
    %s61 = sphi 0, %s47
    %s65 = sphi 0, %s65
    %s67 = sphi 0, %s65
    %s68 = sphi 0, %s67
    %s82 = sphi 0, %s68
    %s86 = sphi 0, %s86
    %s88 = sphi 0, %s86
    %s89 = sphi 0, %s88
    %s103 = sphi 0, %s89
    %s109 = sphi 0, %s111
    %s112 = sphi 0, %s109
    %s113 = sphi 0, %s112
    %s129 = sphi 0, %s113
  $region4: #{tpu_custom_call.1} parent=0 // loop_header_branch
    %13 = sbr.rel (%p11) target = $region8
  $region5: #{tpu_custom_call.1} parent=0 // loop_body
    %s15 = ssub.s32 %s10, 1
    %s16 = ssub.s32 %s10, 2
    %s17 = sadd.s32 %s10, 1
    %s18 = ssub.s32 %s10, %s17
    %p19 = scmp.eq.s32.totalorder %s18, 0
    %s21 = sadd.s32 %s20, 1
    %s22 = scalar_select %p19, %s20, %s21
    %p25 = pneg %p19
    %p26 = scmp.eq.s32.totalorder %s10, 1
    %p27 = por %p25, %p26
    %p28 = scmp.ne.s32.totalorder %s20, %s23
    %p29 = scmp.eq.s32.totalorder %s10, 0
    %p30 = por %p28, %p29
    %p31 = scmp.ne.s32.totalorder %s20, %s23
    %p32 = scmp.eq.s32.totalorder %s15, 1
    %p33 = por %p31, %p32
    %p34 = scmp.ne.s32.totalorder %s23, %s24
    %p35 = scmp.eq.s32.totalorder %s15, 0
    %p36 = por %p34, %p35
    %p37 = scmp.ne.s32.totalorder %s23, %s24
    %p38 = scmp.eq.s32.totalorder %s16, 1
    %p39 = por %p37, %p38
    %p41 = scmp.ne.s32.totalorder %s24, %s40
    %p42 = scmp.eq.s32.totalorder %s16, 0
    %p43 = por %p41, %p42
    %s45 = sadd.s32 %s44, 1
    %p48 = scmp.eq.s32.totalorder %s10, 1
    %p49 = scmp.ne.s32.totalorder %s44, %s46
    %p50 = scmp.eq.s32.totalorder %s10, 0
    %p51 = por %p49, %p50
    %p52 = scmp.ne.s32.totalorder %s44, %s46
    %p53 = scmp.eq.s32.totalorder %s15, 1
    %p54 = por %p52, %p53
    %p55 = scmp.ne.s32.totalorder %s46, %s47
    %p56 = scmp.eq.s32.totalorder %s15, 0
    %p57 = por %p55, %p56
    %p58 = scmp.ne.s32.totalorder %s46, %s47
    %p59 = scmp.eq.s32.totalorder %s16, 1
    %p60 = por %p58, %p59
    %p62 = scmp.ne.s32.totalorder %s47, %s61
    %p63 = scmp.eq.s32.totalorder %s16, 0
    %p64 = por %p62, %p63
    %s66 = sadd.s32 %s65, 1
    %p69 = scmp.eq.s32.totalorder %s10, 1
    %p70 = scmp.ne.s32.totalorder %s65, %s67
    %p71 = scmp.eq.s32.totalorder %s10, 0
    %p72 = por %p70, %p71
    %p73 = scmp.ne.s32.totalorder %s65, %s67
    %p74 = scmp.eq.s32.totalorder %s15, 1
    %p75 = por %p73, %p74
    %p76 = scmp.ne.s32.totalorder %s67, %s68
    %p77 = scmp.eq.s32.totalorder %s15, 0
    %p78 = por %p76, %p77
    %p79 = scmp.ne.s32.totalorder %s67, %s68
    %p80 = scmp.eq.s32.totalorder %s16, 1
    %p81 = por %p79, %p80
    %p83 = scmp.ne.s32.totalorder %s68, %s82
    %p84 = scmp.eq.s32.totalorder %s16, 0
    %p85 = por %p83, %p84
    %s87 = sadd.s32 %s86, 1
    %p90 = scmp.eq.s32.totalorder %s10, 1
    %p91 = scmp.ne.s32.totalorder %s86, %s88
    %p92 = scmp.eq.s32.totalorder %s10, 0
    %p93 = por %p91, %p92
    %p94 = scmp.ne.s32.totalorder %s86, %s88
    %p95 = scmp.eq.s32.totalorder %s15, 1
    %p96 = por %p94, %p95
    %p97 = scmp.ne.s32.totalorder %s88, %s89
    %p98 = scmp.eq.s32.totalorder %s15, 0
    %p99 = por %p97, %p98
    %p100 = scmp.ne.s32.totalorder %s88, %s89
    %p101 = scmp.eq.s32.totalorder %s16, 1
    %p102 = por %p100, %p101
    %p104 = scmp.ne.s32.totalorder %s89, %s103
    %p105 = scmp.eq.s32.totalorder %s16, 0
    %p106 = por %p104, %p105
    %s107 = ssub.s32 %s10, %s17
    %p108 = scmp.eq.s32.totalorder %s107, 0
    %s110 = sadd.s32 %s109, 1
    %s111 = scalar_select %p108, %s109, %s110
    %p114 = pneg %p108
    %p115 = scmp.eq.s32.totalorder %s10, 1
    %p116 = por %p114, %p115
    %p117 = scmp.ne.s32.totalorder %s109, %s112
    %p118 = scmp.eq.s32.totalorder %s10, 0
    %p119 = por %p117, %p118
    %p120 = scmp.ne.s32.totalorder %s109, %s112
    %p121 = scmp.eq.s32.totalorder %s15, 1
    %p122 = por %p120, %p121
    %p123 = scmp.ne.s32.totalorder %s112, %s113
    %p124 = scmp.eq.s32.totalorder %s15, 0
    %p125 = por %p123, %p124
    %p126 = scmp.ne.s32.totalorder %s112, %s113
    %p127 = scmp.eq.s32.totalorder %s16, 1
    %p128 = por %p126, %p127
    %p130 = scmp.ne.s32.totalorder %s113, %s129
    %p131 = scmp.eq.s32.totalorder %s16, 0
    %p132 = por %p130, %p131
    %p133 = scmp.le.s32.totalorder 1, %s10
    %p134 = scmp.lt.s32.totalorder %s10, 3
    %p135 = pnand %p133, %p134
    %p136 = pneg %p135
    // Predicated region
    $region9: #{tpu_custom_call.1} parent=5 // pred_check
      _
    $region10: #{tpu_custom_call.1} parent=5 // pred_check_branch
      %138 = sbr.rel (%p135) target = $region12
    $region11: #{tpu_custom_call.1} parent=5 // pred_region
      %s139 = ssub.s32 %s10, 1
      // Predicated region
      $region13: #{tpu_custom_call.1} parent=11 // pred_check
        %p140 = pneg %p57
      $region14: #{tpu_custom_call.1} parent=11 // pred_check_branch
        %142 = sbr.rel (%p140) target = $region16
      $region15: #{tpu_custom_call.1} parent=11 // pred_region
        _
      $region16: #{tpu_custom_call.1} parent=11 // pred_fallthru
        _
      // Predicated region
      $region17: #{tpu_custom_call.1} parent=11 // pred_check
        %p143 = pneg %p78
      $region18: #{tpu_custom_call.1} parent=11 // pred_check_branch
        %145 = sbr.rel (%p143) target = $region20
      $region19: #{tpu_custom_call.1} parent=11 // pred_region
        _
      $region20: #{tpu_custom_call.1} parent=11 // pred_fallthru
        _
      // Predicated region
      $region21: #{tpu_custom_call.1} parent=11 // pred_check
        %p146 = pneg %p99
      $region22: #{tpu_custom_call.1} parent=11 // pred_check_branch
        %148 = sbr.rel (%p146) target = $region24
      $region23: #{tpu_custom_call.1} parent=11 // pred_region
        _
      $region24: #{tpu_custom_call.1} parent=11 // pred_fallthru
        _
    $region12: #{tpu_custom_call.1} parent=5 // pred_fallthru
      _
    %p149 = scmp.lt.s32.totalorder %s10, 2
    // Predicated region
    $region25: #{tpu_custom_call.1} parent=5 // pred_check
      %p150 = pneg %p149
    $region26: #{tpu_custom_call.1} parent=5 // pred_check_branch
      %152 = sbr.rel (%p150) target = $region28
    $region27: #{tpu_custom_call.1} parent=5 // pred_region
      // Predicated region
      $region29: #{tpu_custom_call.1} parent=27 // pred_check
        %p153 = pneg %p30
      $region30: #{tpu_custom_call.1} parent=27 // pred_check_branch
        %155 = sbr.rel (%p153) target = $region32
      $region31: #{tpu_custom_call.1} parent=27 // pred_region
        %s156 = smul.u32 2, %s10
        %p157 = scmp.lt.s32.totalorder %s156, 3
        %s158 = scalar_select %p157, %s156, 3
        %s159 = smul.addr %s158, 8
        %s160 = smul.addr %s159, 8
        %s161 = scalar_lea.vmem %s0, %s160
        %s162 = smul.u32 2, %s10
      $region32: #{tpu_custom_call.1} parent=27 // pred_fallthru
        _
    $region28: #{tpu_custom_call.1} parent=5 // pred_fallthru
      _
    %p163 = scmp.le.s32.totalorder 1, %s10
    %p164 = scmp.lt.s32.totalorder %s10, 3
    %p165 = pnand %p163, %p164
    %p166 = pneg %p165
    // Predicated region
    $region33: #{tpu_custom_call.1} parent=5 // pred_check
      _
    $region34: #{tpu_custom_call.1} parent=5 // pred_check_branch
      %168 = sbr.rel (%p165) target = $region36
    $region35: #{tpu_custom_call.1} parent=5 // pred_region
      %s169 = ssub.s32 %s10, 1
      %s170 = smul.u32 2, %s15
      %p171 = scmp.lt.s32.totalorder %s170, 3
      %s172 = scalar_select %p171, %s170, 3
      %s173 = smul.addr %s172, 8
      %s174 = smul.addr %s173, 8
      %s175 = scalar_lea.vmem %s0, %s174
      %p176 = pneg %p36
      %p177 = pneg %p33
      %p178 = pneg %p57
      %p179 = pneg %p54
      %p180 = pneg %p78
      %p181 = pneg %p75
      %p182 = pneg %p99
      %p183 = pneg %p96
      %p184 = pneg %p125
      %p185 = pneg %p122
      %s186 = smul.u32 2, %s15
      %p187 = scmp.lt.s32.totalorder %s186, 3
      %s188 = scalar_select %p187, %s186, 3
      %s189 = smul.addr %s188, 2
      %s190 = smul.addr %s189, 8
      %s191 = scalar_lea.vmem %s4, %s190
      %s192 = smul.u32 2, %s15
      %p193 = scmp.lt.s32.totalorder %s192, 3
      %s194 = scalar_select %p193, %s192, 3
      %s195 = smul.addr %s194, 8
      %s196 = smul.addr %s195, 8
      %s197 = scalar_lea.vmem %s0, %s196
      %s198 = smul.u32 2, %s15
      %s199 = smul.u32 2, %s15
      %p200 = scmp.lt.s32.totalorder %s199, 3
      %s201 = scalar_select %p200, %s199, 3
      %s202 = smul.addr %s201, 2
      %s203 = smul.addr %s202, 8
      %s204 = scalar_lea.vmem %s4, %s203
      %s205 = smul.u32 2, %s15
      %v206 = vld [vmem:[%s197] sm:$0xff]
      %v207 = vld [vmem:[%s197 + $0x8] sm:$0xff]
      %v208 = vld [vmem:[%s197 + $0x10] sm:$0xff]
      %v209 = vld [vmem:[%s197 + $0x18] sm:$0xff]
      %v210 = vld [vmem:[%s197 + $0x20] sm:$0xff]
      %v211 = vld [vmem:[%s197 + $0x28] sm:$0xff]
      %v212 = vld [vmem:[%s197 + $0x30] sm:$0xff]
      %v213 = vld [vmem:[%s197 + $0x38] sm:$0xff]
      %214 = vxpose.xlu0.b32.start [1/16] %v206, 128
      %215 = vxpose.xlu0.b32.cont [2/16] %v207, 128
      %216 = vxpose.xlu0.b32.cont [3/16] %v208, 128
      %217 = vxpose.xlu0.b32.cont [4/16] %v209, 128
      %218 = vxpose.xlu0.b32.cont [5/16] %v210, 128
      %219 = vxpose.xlu0.b32.cont [6/16] %v211, 128
      %220 = vxpose.xlu0.b32.cont [7/16] %v212, 128
      %221 = vxpose.xlu0.b32.cont [8/16] %v213, 128
      %222 = vxpose.xlu0.b32.cont [9/16] 0.0, 128
      %223 = vxpose.xlu0.b32.cont [10/16] 0.0, 128
      %224 = vxpose.xlu0.b32.cont [11/16] 0.0, 128
      %225 = vxpose.xlu0.b32.cont [12/16] 0.0, 128
      %226 = vxpose.xlu0.b32.cont [13/16] 0.0, 128
      %227 = vxpose.xlu0.b32.cont [14/16] 0.0, 128
      %228 = vxpose.xlu0.b32.cont [15/16] 0.0, 128
      %229 = vxpose.xlu0.b32.end [16/16] 0.0, 128
      %v230 = vpop.trf.xlu0
      %v231 = vpop.trf.xlu0
      %v232 = vpop.trf.xlu0
      %v233 = vpop.trf.xlu0
      %v234 = vpop.trf.xlu0
      %v235 = vpop.trf.xlu0
      %v236 = vpop.trf.xlu0
      %v237 = vpop.trf.xlu0
      %v238 = vpop.trf.xlu0
      %v239 = vpop.trf.xlu0
      %v240 = vpop.trf.xlu0
      %v241 = vpop.trf.xlu0
      %v242 = vpop.trf.xlu0
      %v243 = vpop.trf.xlu0
      %v244 = vpop.trf.xlu0
      %v245 = vpop.trf.xlu0
      %s246 = scalar_lea.vmem %s197, 64
      %v247 = vld [vmem:[%s246] sm:$0xff]
      %v248 = vld [vmem:[%s246 + $0x8] sm:$0xff]
      %v249 = vld [vmem:[%s246 + $0x10] sm:$0xff]
      %v250 = vld [vmem:[%s246 + $0x18] sm:$0xff]
      %v251 = vld [vmem:[%s246 + $0x20] sm:$0xff]
      %v252 = vld [vmem:[%s246 + $0x28] sm:$0xff]
      %v253 = vld [vmem:[%s246 + $0x30] sm:$0xff]
      %v254 = vld [vmem:[%s246 + $0x38] sm:$0xff]
      %255 = vxpose.xlu0.b32.start [1/16] %v247, 128
      %256 = vxpose.xlu0.b32.cont [2/16] %v248, 128
      %257 = vxpose.xlu0.b32.cont [3/16] %v249, 128
      %258 = vxpose.xlu0.b32.cont [4/16] %v250, 128
      %259 = vxpose.xlu0.b32.cont [5/16] %v251, 128
      %260 = vxpose.xlu0.b32.cont [6/16] %v252, 128
      %261 = vxpose.xlu0.b32.cont [7/16] %v253, 128
      %262 = vxpose.xlu0.b32.cont [8/16] %v254, 128
      %263 = vxpose.xlu0.b32.cont [9/16] 0.0, 128
      %264 = vxpose.xlu0.b32.cont [10/16] 0.0, 128
      %265 = vxpose.xlu0.b32.cont [11/16] 0.0, 128
      %266 = vxpose.xlu0.b32.cont [12/16] 0.0, 128
      %267 = vxpose.xlu0.b32.cont [13/16] 0.0, 128
      %268 = vxpose.xlu0.b32.cont [14/16] 0.0, 128
      %269 = vxpose.xlu0.b32.cont [15/16] 0.0, 128
      %270 = vxpose.xlu0.b32.end [16/16] 0.0, 128
      %v271 = vpop.trf.xlu0
      %v272 = vpop.trf.xlu0
      %v273 = vpop.trf.xlu0
      %v274 = vpop.trf.xlu0
      %v275 = vpop.trf.xlu0
      %v276 = vpop.trf.xlu0
      %v277 = vpop.trf.xlu0
      %v278 = vpop.trf.xlu0
      %v279 = vpop.trf.xlu0
      %v280 = vpop.trf.xlu0
      %v281 = vpop.trf.xlu0
      %v282 = vpop.trf.xlu0
      %v283 = vpop.trf.xlu0
      %v284 = vpop.trf.xlu0
      %v285 = vpop.trf.xlu0
      %v286 = vpop.trf.xlu0
      %v287 = vmul.f32 %v230, %v230
      %v288 = vmul.f32 %v231, %v231
      %v289 = vmul.f32 %v271, %v271
      %v290 = vmul.f32 %v272, %v272
      %vm291 = vcmask 523264
      %v292 = vsel %vm291, %v287, 0.0
      %293 = vadd.xlane.f32.xlu0 %v292
      %v294 = vpop.xlane.xlu0 %293
      %v295 = vsel %vm291, %v288, 0.0
      %296 = vadd.xlane.f32.xlu0 %v295
      %v297 = vpop.xlane.xlu0 %296
      %v298 = vsel %vm291, %v289, 0.0
      %299 = vadd.xlane.f32.xlu0 %v298
      %v300 = vpop.xlane.xlu0 %299
      %v301 = vsel %vm291, %v290, 0.0
      %302 = vadd.xlane.f32.xlu0 %v301
      %v303 = vpop.xlane.xlu0 %302
      %v304 = vmax.f32 %v294, 1e-24
      %v305 = vmax.f32 %v297, 1e-24
      %v306 = vmax.f32 %v300, 1e-24
      %v307 = vmax.f32 %v303, 1e-24
      %v308 = vrsqrt.pop %v304
      %v309 = vrsqrt.pop %v305
      %v310 = vrsqrt.pop %v306
      %v311 = vrsqrt.pop %v307
      %v312 = vmul.f32 %v230, %v308
      %v313 = vmul.f32 %v231, %v309
      %v314 = vmul.f32 %v271, %v310
      %v315 = vmul.f32 %v272, %v311
      %v316 = vld [vmem:[%s1] sm:$0xff]
      %v317 = vld [vmem:[%s1 + $0x8] sm:$0x1f]
      %v318 = vld [vmem:[%s2] sm:$0x1]
      %v320 = vlaneseq
      %v321 = vshrl.u32 %v320, 7
      %v322 = vsub.s32 0, %v321
      %v323 = vrot.slane %v318, %v322
      %v326 = vsel %vm291, %v312, 0
      %v329 = vsel %vm291, %v313, 0
      %v332 = vsel %vm291, %v314, 0
      %v335 = vsel %vm291, %v315, 0
      %v338 = vsel %vm291, %v316, 0
      %v341 = vsel %vm291, %v317, 0
      %343 = vmatprep.subr.mxu0 0.0
      %344 = vmatpush1.xpose.msra.mxu0 0.0
      %345 = vmatprep.subr.mxu0 0.0
      %346 = vmatpush1.xpose.msra.mxu0 0.0
      %347 = vmatprep.subr.mxu0 0.0
      %348 = vmatpush1.xpose.msra.mxu0 0.0
      %349 = vmatprep.subr.mxu0 0.0
      %350 = vmatpush1.xpose.msra.mxu0 0.0
      %351 = vmatprep.subr.mxu0 0.0
      %352 = vmatpush1.xpose.msra.mxu0 0.0
      %353 = vmatprep.subr.mxu0 0.0
      %354 = vmatpush1.xpose.msra.mxu0 0.0
      %355 = vmatprep.subr.mxu0 0.0
      %356 = vmatpush1.xpose.msra.mxu0 0.0
      %357 = vmatprep.subr.mxu0 0.0
      %358 = vmatpush1.xpose.msra.mxu0 0.0
      %359 = vmatprep.subr.mxu0 0.0
      %360 = vmatpush1.xpose.msra.mxu0 0.0
      %361 = vmatprep.subr.mxu0 0.0
      %362 = vmatpush1.xpose.msra.mxu0 0.0
      %363 = vmatprep.subr.mxu0 0.0
      %364 = vmatpush1.xpose.msra.mxu0 0.0
      %365 = vmatprep.subr.mxu0 0.0
      %366 = vmatpush1.xpose.msra.mxu0 0.0
      %367 = vmatprep.subr.mxu0 0.0
      %368 = vmatpush1.xpose.msra.mxu0 0.0
      %369 = vmatprep.subr.mxu0 0.0
      %370 = vmatpush1.xpose.msra.mxu0 0.0
      %371 = vmatprep.subr.mxu0 0.0
      %372 = vmatpush1.xpose.msra.mxu0 %v341
      %373 = vmatprep.subr.mxu0 0.0
      %374 = vmatpush1.xpose.msra.mxu0 %v338
      %375 = vmatprep.subr.mxu0 0.0
      %376 = vmatpush2.xpose.msra.mxu0 0.0
      %377 = vmatprep.subr.mxu0 0.0
      %378 = vmatpush2.xpose.msra.mxu0 0.0
      %379 = vmatprep.subr.mxu0 0.0
      %380 = vmatpush2.xpose.msra.mxu0 0.0
      %381 = vmatprep.subr.mxu0 0.0
      %382 = vmatpush2.xpose.msra.mxu0 0.0
      %383 = vmatprep.subr.mxu0 0.0
      %384 = vmatpush2.xpose.msra.mxu0 0.0
      %385 = vmatprep.subr.mxu0 0.0
      %386 = vmatpush2.xpose.msra.mxu0 0.0
      %387 = vmatprep.subr.mxu0 0.0
      %388 = vmatpush2.xpose.msra.mxu0 0.0
      %389 = vmatprep.subr.mxu0 0.0
      %390 = vmatpush2.xpose.msra.mxu0 0.0
      %391 = vmatprep.subr.mxu0 0.0
      %392 = vmatpush2.xpose.msra.mxu0 0.0
      %393 = vmatprep.subr.mxu0 0.0
      %394 = vmatpush2.xpose.msra.mxu0 0.0
      %395 = vmatprep.subr.mxu0 0.0
      %396 = vmatpush2.xpose.msra.mxu0 0.0
      %397 = vmatprep.subr.mxu0 0.0
      %398 = vmatpush2.xpose.msra.mxu0 0.0
      %399 = vmatprep.subr.mxu0 0.0
      %400 = vmatpush2.xpose.msra.mxu0 0.0
      %401 = vmatprep.subr.mxu0 0.0
      %402 = vmatpush2.xpose.msra.mxu0 0.0
      %403 = vmatprep.subr.mxu0 0.0
      %404 = vmatpush2.xpose.msra.mxu0 0.0
      %405 = vmatprep.subr.mxu0 0.0
      %406 = vmatpush2.xpose.msra.mxu0 0.0
      %407 = vmatprep.mubr.f32.mxu0 0.0
      %408 = vmatmul.mubr.f32.gmra.mxu0 %v326
      %v409 = vpop.f32.mrf.mxu0
      %v410 = vadd.f32 %v323, %v409
      %v411 = vpop.f32.mrf.mxu0
      %412 = vmatprep.mubr.f32.mxu0 0.0
      %413 = vmatmul.mubr.f32.gmra.mxu0 %v329
      %v414 = vpop.f32.mrf.mxu0
      %v415 = vadd.f32 %v323, %v414
      %v416 = vpop.f32.mrf.mxu0
      %417 = vmatprep.mubr.f32.mxu0 0.0
      %418 = vmatmul.mubr.f32.gmra.mxu0 %v332
      %v419 = vpop.f32.mrf.mxu0
      %v420 = vadd.f32 %v323, %v419
      %v421 = vpop.f32.mrf.mxu0
      %422 = vmatprep.mubr.f32.mxu0 0.0
      %423 = vmatmul.mubr.f32.gmra.mxu0 %v335
      %v424 = vpop.f32.mrf.mxu0
      %v425 = vadd.f32 %v323, %v424
      %v426 = vpop.f32.mrf.mxu0
      %427 = vdwg.mxu0
      %vm428 = vcmask 105472
      %v429 = vsel %vm428, %v410, -inf
      %430 = vmax.xlane.f32.xlu0 %v429
      %v431 = vpop.xlane.xlu0 %430
      %v432 = vsel %vm428, %v415, -inf
      %433 = vmax.xlane.f32.xlu0 %v432
      %v434 = vpop.xlane.xlu0 %433
      %v435 = vsel %vm428, %v420, -inf
      %436 = vmax.xlane.f32.xlu0 %v435
      %v437 = vpop.xlane.xlu0 %436
      %v438 = vsel %vm428, %v425, -inf
      %439 = vmax.xlane.f32.xlu0 %v438
      %v440 = vpop.xlane.xlu0 %439
      %v441 = vsub.f32 %v410, %v431
      %v442 = vsub.f32 %v415, %v434
      %v443 = vsub.f32 %v420, %v437
      %v444 = vsub.f32 %v425, %v440
      %v445 = vmul.f32 %v441, 1.442695
      %v446 = vpow.pop %v445
      %v447 = vmul.f32 %v442, 1.442695
      %v448 = vpow.pop %v447
      %v449 = vmul.f32 %v443, 1.442695
      %v450 = vpow.pop %v449
      %v451 = vmul.f32 %v444, 1.442695
      %v452 = vpow.pop %v451
      %v453 = vsel %vm428, %v446, 0.0
      %454 = vadd.xlane.f32.xlu0 %v453
      %v455 = vpop.xlane.xlu0 %454
      %v456 = vsel %vm428, %v448, 0.0
      %457 = vadd.xlane.f32.xlu0 %v456
      %v458 = vpop.xlane.xlu0 %457
      %v459 = vsel %vm428, %v450, 0.0
      %460 = vadd.xlane.f32.xlu0 %v459
      %v461 = vpop.xlane.xlu0 %460
      %v462 = vsel %vm428, %v452, 0.0
      %463 = vadd.xlane.f32.xlu0 %v462
      %v464 = vpop.xlane.xlu0 %463
      %v465 = vrcp.pop %v455
      %v466 = vrcp.pop %v458
      %v467 = vrcp.pop %v461
      %v468 = vrcp.pop %v464
      %v469 = vmul.f32 %v446, %v465
      %v470 = vmul.f32 %v448, %v466
      %v471 = vmul.f32 %v450, %v467
      %v472 = vmul.f32 %v452, %v468
      %v473 = vld [vmem:[%s3] sm:$0xff]
      %v474 = vld [vmem:[%s3 + $0x8] sm:$0x1f]
      %475 = vxpose.xlu0.b32.start [1/16] %v469, 128
      %476 = vxpose.xlu0.b32.cont [2/16] %v470, 128
      %477 = vxpose.xlu0.b32.cont [3/16] 0.0, 128
      %478 = vxpose.xlu0.b32.cont [4/16] 0.0, 128
      %479 = vxpose.xlu0.b32.cont [5/16] 0.0, 128
      %480 = vxpose.xlu0.b32.cont [6/16] 0.0, 128
      %481 = vxpose.xlu0.b32.cont [7/16] 0.0, 128
      %482 = vxpose.xlu0.b32.cont [8/16] 0.0, 128
      %483 = vxpose.xlu0.b32.cont [9/16] 0.0, 128
      %484 = vxpose.xlu0.b32.cont [10/16] 0.0, 128
      %485 = vxpose.xlu0.b32.cont [11/16] 0.0, 128
      %486 = vxpose.xlu0.b32.cont [12/16] 0.0, 128
      %487 = vxpose.xlu0.b32.cont [13/16] 0.0, 128
      %488 = vxpose.xlu0.b32.cont [14/16] 0.0, 128
      %489 = vxpose.xlu0.b32.cont [15/16] 0.0, 128
      %490 = vxpose.xlu0.b32.end [16/16] 0.0, 128
      %v491 = vpop.trf.xlu0
      %v492 = vpop.trf.xlu0
      %v493 = vpop.trf.xlu0
      %v494 = vpop.trf.xlu0
      %v495 = vpop.trf.xlu0
      %v496 = vpop.trf.xlu0
      %v497 = vpop.trf.xlu0
      %v498 = vpop.trf.xlu0
      %v499 = vpop.trf.xlu0
      %v500 = vpop.trf.xlu0
      %v501 = vpop.trf.xlu0
      %v502 = vpop.trf.xlu0
      %v503 = vpop.trf.xlu0
      %v504 = vpop.trf.xlu0
      %v505 = vpop.trf.xlu0
      %v506 = vpop.trf.xlu0
      %vm507 = vcmask 130048
      %v509 = vsel %vm507, %v491, 0
      %v512 = vsel %vm507, %v492, 0
      %514 = vmatprep.subr.mxu0 0.0
      %515 = vmatpush1.msra.mxu0 0.0
      %516 = vmatprep.subr.mxu0 0.0
      %517 = vmatpush1.msra.mxu0 0.0
      %518 = vmatprep.subr.mxu0 0.0
      %519 = vmatpush1.msra.mxu0 0.0
      %520 = vmatprep.subr.mxu0 0.0
      %521 = vmatpush1.msra.mxu0 0.0
      %522 = vmatprep.subr.mxu0 0.0
      %523 = vmatpush1.msra.mxu0 0.0
      %524 = vmatprep.subr.mxu0 0.0
      %525 = vmatpush1.msra.mxu0 0.0
      %526 = vmatprep.subr.mxu0 0.0
      %527 = vmatpush1.msra.mxu0 0.0
      %528 = vmatprep.subr.mxu0 0.0
      %529 = vmatpush1.msra.mxu0 0.0
      %530 = vmatprep.subr.mxu0 0.0
      %531 = vmatpush1.msra.mxu0 0.0
      %532 = vmatprep.subr.mxu0 0.0
      %533 = vmatpush1.msra.mxu0 0.0
      %534 = vmatprep.subr.mxu0 0.0
      %535 = vmatpush1.msra.mxu0 0.0
      %536 = vmatprep.subr.mxu0 0.0
      %537 = vmatpush1.msra.mxu0 0.0
      %538 = vmatprep.subr.mxu0 0.0
      %539 = vmatpush1.msra.mxu0 0.0
      %540 = vmatprep.subr.mxu0 0.0
      %541 = vmatpush1.msra.mxu0 0.0
      %542 = vmatprep.subr.mxu0 0.0
      %543 = vmatpush1.msra.mxu0 %v313
      %544 = vmatprep.subr.mxu0 0.0
      %545 = vmatpush1.msra.mxu0 %v312
      %546 = vmatprep.subr.mxu0 0.0
      %547 = vmatpush2.msra.mxu0 0.0
      %548 = vmatprep.subr.mxu0 0.0
      %549 = vmatpush2.msra.mxu0 0.0
      %550 = vmatprep.subr.mxu0 0.0
      %551 = vmatpush2.msra.mxu0 0.0
      %552 = vmatprep.subr.mxu0 0.0
      %553 = vmatpush2.msra.mxu0 0.0
      %554 = vmatprep.subr.mxu0 0.0
      %555 = vmatpush2.msra.mxu0 0.0
      %556 = vmatprep.subr.mxu0 0.0
      %557 = vmatpush2.msra.mxu0 0.0
      %558 = vmatprep.subr.mxu0 0.0
      %559 = vmatpush2.msra.mxu0 0.0
      %560 = vmatprep.subr.mxu0 0.0
      %561 = vmatpush2.msra.mxu0 0.0
      %562 = vmatprep.subr.mxu0 0.0
      %563 = vmatpush2.msra.mxu0 0.0
      %564 = vmatprep.subr.mxu0 0.0
      %565 = vmatpush2.msra.mxu0 0.0
      %566 = vmatprep.subr.mxu0 0.0
      %567 = vmatpush2.msra.mxu0 0.0
      %568 = vmatprep.subr.mxu0 0.0
      %569 = vmatpush2.msra.mxu0 0.0
      %570 = vmatprep.subr.mxu0 0.0
      %571 = vmatpush2.msra.mxu0 0.0
      %572 = vmatprep.subr.mxu0 0.0
      %573 = vmatpush2.msra.mxu0 0.0
      %574 = vmatprep.subr.mxu0 0.0
      %575 = vmatpush2.msra.mxu0 0.0
      %576 = vmatprep.subr.mxu0 0.0
      %577 = vmatpush2.msra.mxu0 0.0
      %578 = vmatprep.mubr.f32.mxu0 0.0
      %579 = vmatmul.mubr.f32.gmra.mxu0 %v509
      %v580 = vpop.f32.mrf.mxu0
      %v581 = vadd.f32 0.0, %v580
      %v582 = vpop.f32.mrf.mxu0
      %583 = vmatprep.mubr.f32.mxu0 0.0
      %584 = vmatmul.mubr.f32.gmra.mxu0 %v512
      %v585 = vpop.f32.mrf.mxu0
      %v586 = vadd.f32 0.0, %v585
      %v587 = vpop.f32.mrf.mxu0
      %588 = vdwg.mxu0
      %589 = vmatprep.subr.mxu0 0.0
      %590 = vmatpush1.msra.mxu0 0.0
      %591 = vmatprep.subr.mxu0 0.0
      %592 = vmatpush1.msra.mxu0 0.0
      %593 = vmatprep.subr.mxu0 0.0
      %594 = vmatpush1.msra.mxu0 0.0
      %595 = vmatprep.subr.mxu0 0.0
      %596 = vmatpush1.msra.mxu0 0.0
      %597 = vmatprep.subr.mxu0 0.0
      %598 = vmatpush1.msra.mxu0 0.0
      %599 = vmatprep.subr.mxu0 0.0
      %600 = vmatpush1.msra.mxu0 0.0
      %601 = vmatprep.subr.mxu0 0.0
      %602 = vmatpush1.msra.mxu0 0.0
      %603 = vmatprep.subr.mxu0 0.0
      %604 = vmatpush1.msra.mxu0 0.0
      %605 = vmatprep.subr.mxu0 0.0
      %606 = vmatpush1.msra.mxu0 0.0
      %607 = vmatprep.subr.mxu0 0.0
      %608 = vmatpush1.msra.mxu0 0.0
      %609 = vmatprep.subr.mxu0 0.0
      %610 = vmatpush1.msra.mxu0 0.0
      %611 = vmatprep.subr.mxu0 0.0
      %612 = vmatpush1.msra.mxu0 0.0
      %613 = vmatprep.subr.mxu0 0.0
      %614 = vmatpush1.msra.mxu0 0.0
      %615 = vmatprep.subr.mxu0 0.0
      %616 = vmatpush1.msra.mxu0 0.0
      %617 = vmatprep.subr.mxu0 0.0
      %618 = vmatpush1.msra.mxu0 1.0
      %619 = vmatprep.subr.mxu0 0.0
      %620 = vmatpush1.msra.mxu0 1.0
      %621 = vmatprep.subr.mxu0 0.0
      %622 = vmatpush2.msra.mxu0 0.0
      %623 = vmatprep.subr.mxu0 0.0
      %624 = vmatpush2.msra.mxu0 0.0
      %625 = vmatprep.subr.mxu0 0.0
      %626 = vmatpush2.msra.mxu0 0.0
      %627 = vmatprep.subr.mxu0 0.0
      %628 = vmatpush2.msra.mxu0 0.0
      %629 = vmatprep.subr.mxu0 0.0
      %630 = vmatpush2.msra.mxu0 0.0
      %631 = vmatprep.subr.mxu0 0.0
      %632 = vmatpush2.msra.mxu0 0.0
      %633 = vmatprep.subr.mxu0 0.0
      %634 = vmatpush2.msra.mxu0 0.0
      %635 = vmatprep.subr.mxu0 0.0
      %636 = vmatpush2.msra.mxu0 0.0
      %637 = vmatprep.subr.mxu0 0.0
      %638 = vmatpush2.msra.mxu0 0.0
      %639 = vmatprep.subr.mxu0 0.0
      %640 = vmatpush2.msra.mxu0 0.0
      %641 = vmatprep.subr.mxu0 0.0
      %642 = vmatpush2.msra.mxu0 0.0
      %643 = vmatprep.subr.mxu0 0.0
      %644 = vmatpush2.msra.mxu0 0.0
      %645 = vmatprep.subr.mxu0 0.0
      %646 = vmatpush2.msra.mxu0 0.0
      %647 = vmatprep.subr.mxu0 0.0
      %648 = vmatpush2.msra.mxu0 0.0
      %649 = vmatprep.subr.mxu0 0.0
      %650 = vmatpush2.msra.mxu0 0.0
      %651 = vmatprep.subr.mxu0 0.0
      %652 = vmatpush2.msra.mxu0 0.0
      %653 = vmatprep.mubr.f32.mxu0 0.0
      %654 = vmatmul.mubr.f32.gmra.mxu0 %v509
      %v655 = vpop.f32.mrf.mxu0
      %v656 = vadd.f32 0.0, %v655
      %v657 = vpop.f32.mrf.mxu0
      %658 = vmatprep.mubr.f32.mxu0 0.0
      %659 = vmatmul.mubr.f32.gmra.mxu0 %v512
      %v660 = vpop.f32.mrf.mxu0
      %v661 = vadd.f32 0.0, %v660
      %v662 = vpop.f32.mrf.mxu0
      %663 = vdwg.mxu0
      %665 = vset.pattern.permute.xlu0 0
      %666 = vperm.xlu0 %665, %v656
      %v667 = vpop.permute.xlu0 %666
      %670 = vset.pattern.permute.xlu0 0
      %671 = vperm.xlu0 %670, %v661
      %v672 = vpop.permute.xlu0 %671
      %v674 = vmul.f32 %v473, %v667
      %v675 = vmul.f32 %v474, %v672
      %v676 = vsub.f32 %v581, %v674
      %v677 = vsub.f32 %v586, %v675
      %v678 = vmul.f32 %v676, %v676
      %v679 = vmul.f32 %v677, %v677
      %v680 = vsel %vm291, %v678, 0.0
      %681 = vadd.xlane.f32.xlu0 %v680
      %v682 = vpop.xlane.xlu0 %681
      %vm683 = vcmask 520192
      %v684 = vsel %vm683, %v679, 0.0
      %685 = vadd.xlane.f32.xlu0 %v684
      %v686 = vpop.xlane.xlu0 %685
      %v687 = vmax.f32 %v682, 1e-24
      %v688 = vmax.f32 %v686, 1e-24
      %v689 = vrsqrt.pop %v687
      %v690 = vrsqrt.pop %v688
      %v691 = vmul.f32 %v676, %v689
      %v692 = vmul.f32 %v677, %v690
      %v693 = vmul.f32 %v691, %v691
      %v694 = vmul.f32 %v692, %v692
      %v695 = vsel %vm291, %v693, 0.0
      %v696 = vsel %vm683, %v694, 0.0
      %v697 = vadd.f32 %v695, %v696
      %698 = vadd.xlane.f32.xlu0 %v697
      %v699 = vpop.xlane.xlu0 %698
      %v700 = vrot.slane %v699, 4
      %v701 = vadd.f32 %v699, %v700
      %v702 = vrot.slane %v701, 2
      %v703 = vadd.f32 %v701, %v702
      %v704 = vrot.slane %v703, 1
      %v705 = vadd.f32 %v703, %v704
      %s706 = vtos %v705
      %s707 = smax.f32 %s706, 1e-24
      %v708 = vstv %s707
      %v709 = vrsqrt.pop %v708
      %s710 = vtos %v709
      %v711 = vstv %s710
      %v712 = vmul.f32 %v691, %v711
      %v713 = vmul.f32 %v692, %v711
      %714 = vst.msk [vmem:[%s204] sm:$0xff] %vm291, %v712
      %715 = vst.msk [vmem:[%s204 + $0x8] sm:$0x1f] %vm683, %v713
      %716 = vxpose.xlu0.b32.start [1/16] %v471, 128
      %717 = vxpose.xlu0.b32.cont [2/16] %v472, 128
      %718 = vxpose.xlu0.b32.cont [3/16] 0.0, 128
      %719 = vxpose.xlu0.b32.cont [4/16] 0.0, 128
      %720 = vxpose.xlu0.b32.cont [5/16] 0.0, 128
      %721 = vxpose.xlu0.b32.cont [6/16] 0.0, 128
      %722 = vxpose.xlu0.b32.cont [7/16] 0.0, 128
      %723 = vxpose.xlu0.b32.cont [8/16] 0.0, 128
      %724 = vxpose.xlu0.b32.cont [9/16] 0.0, 128
      %725 = vxpose.xlu0.b32.cont [10/16] 0.0, 128
      %726 = vxpose.xlu0.b32.cont [11/16] 0.0, 128
      %727 = vxpose.xlu0.b32.cont [12/16] 0.0, 128
      %728 = vxpose.xlu0.b32.cont [13/16] 0.0, 128
      %729 = vxpose.xlu0.b32.cont [14/16] 0.0, 128
      %730 = vxpose.xlu0.b32.cont [15/16] 0.0, 128
      %731 = vxpose.xlu0.b32.end [16/16] 0.0, 128
      %v732 = vpop.trf.xlu0
      %v733 = vpop.trf.xlu0
      %v734 = vpop.trf.xlu0
      %v735 = vpop.trf.xlu0
      %v736 = vpop.trf.xlu0
      %v737 = vpop.trf.xlu0
      %v738 = vpop.trf.xlu0
      %v739 = vpop.trf.xlu0
      %v740 = vpop.trf.xlu0
      %v741 = vpop.trf.xlu0
      %v742 = vpop.trf.xlu0
      %v743 = vpop.trf.xlu0
      %v744 = vpop.trf.xlu0
      %v745 = vpop.trf.xlu0
      %v746 = vpop.trf.xlu0
      %v747 = vpop.trf.xlu0
      %v749 = vsel %vm507, %v732, 0
      %v752 = vsel %vm507, %v733, 0
      %754 = vmatprep.subr.mxu0 0.0
      %755 = vmatpush1.msra.mxu0 0.0
      %756 = vmatprep.subr.mxu0 0.0
      %757 = vmatpush1.msra.mxu0 0.0
      %758 = vmatprep.subr.mxu0 0.0
      %759 = vmatpush1.msra.mxu0 0.0
      %760 = vmatprep.subr.mxu0 0.0
      %761 = vmatpush1.msra.mxu0 0.0
      %762 = vmatprep.subr.mxu0 0.0
      %763 = vmatpush1.msra.mxu0 0.0
      %764 = vmatprep.subr.mxu0 0.0
      %765 = vmatpush1.msra.mxu0 0.0
      %766 = vmatprep.subr.mxu0 0.0
      %767 = vmatpush1.msra.mxu0 0.0
      %768 = vmatprep.subr.mxu0 0.0
      %769 = vmatpush1.msra.mxu0 0.0
      %770 = vmatprep.subr.mxu0 0.0
      %771 = vmatpush1.msra.mxu0 0.0
      %772 = vmatprep.subr.mxu0 0.0
      %773 = vmatpush1.msra.mxu0 0.0
      %774 = vmatprep.subr.mxu0 0.0
      %775 = vmatpush1.msra.mxu0 0.0
      %776 = vmatprep.subr.mxu0 0.0
      %777 = vmatpush1.msra.mxu0 0.0
      %778 = vmatprep.subr.mxu0 0.0
      %779 = vmatpush1.msra.mxu0 0.0
      %780 = vmatprep.subr.mxu0 0.0
      %781 = vmatpush1.msra.mxu0 0.0
      %782 = vmatprep.subr.mxu0 0.0
      %783 = vmatpush1.msra.mxu0 %v315
      %784 = vmatprep.subr.mxu0 0.0
      %785 = vmatpush1.msra.mxu0 %v314
      %786 = vmatprep.subr.mxu0 0.0
      %787 = vmatpush2.msra.mxu0 0.0
      %788 = vmatprep.subr.mxu0 0.0
      %789 = vmatpush2.msra.mxu0 0.0
      %790 = vmatprep.subr.mxu0 0.0
      %791 = vmatpush2.msra.mxu0 0.0
      %792 = vmatprep.subr.mxu0 0.0
      %793 = vmatpush2.msra.mxu0 0.0
      %794 = vmatprep.subr.mxu0 0.0
      %795 = vmatpush2.msra.mxu0 0.0
      %796 = vmatprep.subr.mxu0 0.0
      %797 = vmatpush2.msra.mxu0 0.0
      %798 = vmatprep.subr.mxu0 0.0
      %799 = vmatpush2.msra.mxu0 0.0
      %800 = vmatprep.subr.mxu0 0.0
      %801 = vmatpush2.msra.mxu0 0.0
      %802 = vmatprep.subr.mxu0 0.0
      %803 = vmatpush2.msra.mxu0 0.0
      %804 = vmatprep.subr.mxu0 0.0
      %805 = vmatpush2.msra.mxu0 0.0
      %806 = vmatprep.subr.mxu0 0.0
      %807 = vmatpush2.msra.mxu0 0.0
      %808 = vmatprep.subr.mxu0 0.0
      %809 = vmatpush2.msra.mxu0 0.0
      %810 = vmatprep.subr.mxu0 0.0
      %811 = vmatpush2.msra.mxu0 0.0
      %812 = vmatprep.subr.mxu0 0.0
      %813 = vmatpush2.msra.mxu0 0.0
      %814 = vmatprep.subr.mxu0 0.0
      %815 = vmatpush2.msra.mxu0 0.0
      %816 = vmatprep.subr.mxu0 0.0
      %817 = vmatpush2.msra.mxu0 0.0
      %818 = vmatprep.mubr.f32.mxu0 0.0
      %819 = vmatmul.mubr.f32.gmra.mxu0 %v749
      %v820 = vpop.f32.mrf.mxu0
      %v821 = vadd.f32 0.0, %v820
      %v822 = vpop.f32.mrf.mxu0
      %823 = vmatprep.mubr.f32.mxu0 0.0
      %824 = vmatmul.mubr.f32.gmra.mxu0 %v752
      %v825 = vpop.f32.mrf.mxu0
      %v826 = vadd.f32 0.0, %v825
      %v827 = vpop.f32.mrf.mxu0
      %828 = vdwg.mxu0
      %829 = vmatprep.subr.mxu0 0.0
      %830 = vmatpush1.msra.mxu0 0.0
      %831 = vmatprep.subr.mxu0 0.0
      %832 = vmatpush1.msra.mxu0 0.0
      %833 = vmatprep.subr.mxu0 0.0
      %834 = vmatpush1.msra.mxu0 0.0
      %835 = vmatprep.subr.mxu0 0.0
      %836 = vmatpush1.msra.mxu0 0.0
      %837 = vmatprep.subr.mxu0 0.0
      %838 = vmatpush1.msra.mxu0 0.0
      %839 = vmatprep.subr.mxu0 0.0
      %840 = vmatpush1.msra.mxu0 0.0
      %841 = vmatprep.subr.mxu0 0.0
      %842 = vmatpush1.msra.mxu0 0.0
      %843 = vmatprep.subr.mxu0 0.0
      %844 = vmatpush1.msra.mxu0 0.0
      %845 = vmatprep.subr.mxu0 0.0
      %846 = vmatpush1.msra.mxu0 0.0
      %847 = vmatprep.subr.mxu0 0.0
      %848 = vmatpush1.msra.mxu0 0.0
      %849 = vmatprep.subr.mxu0 0.0
      %850 = vmatpush1.msra.mxu0 0.0
      %851 = vmatprep.subr.mxu0 0.0
      %852 = vmatpush1.msra.mxu0 0.0
      %853 = vmatprep.subr.mxu0 0.0
      %854 = vmatpush1.msra.mxu0 0.0
      %855 = vmatprep.subr.mxu0 0.0
      %856 = vmatpush1.msra.mxu0 0.0
      %857 = vmatprep.subr.mxu0 0.0
      %858 = vmatpush1.msra.mxu0 1.0
      %859 = vmatprep.subr.mxu0 0.0
      %860 = vmatpush1.msra.mxu0 1.0
      %861 = vmatprep.subr.mxu0 0.0
      %862 = vmatpush2.msra.mxu0 0.0
      %863 = vmatprep.subr.mxu0 0.0
      %864 = vmatpush2.msra.mxu0 0.0
      %865 = vmatprep.subr.mxu0 0.0
      %866 = vmatpush2.msra.mxu0 0.0
      %867 = vmatprep.subr.mxu0 0.0
      %868 = vmatpush2.msra.mxu0 0.0
      %869 = vmatprep.subr.mxu0 0.0
      %870 = vmatpush2.msra.mxu0 0.0
      %871 = vmatprep.subr.mxu0 0.0
      %872 = vmatpush2.msra.mxu0 0.0
      %873 = vmatprep.subr.mxu0 0.0
      %874 = vmatpush2.msra.mxu0 0.0
      %875 = vmatprep.subr.mxu0 0.0
      %876 = vmatpush2.msra.mxu0 0.0
      %877 = vmatprep.subr.mxu0 0.0
      %878 = vmatpush2.msra.mxu0 0.0
      %879 = vmatprep.subr.mxu0 0.0
      %880 = vmatpush2.msra.mxu0 0.0
      %881 = vmatprep.subr.mxu0 0.0
      %882 = vmatpush2.msra.mxu0 0.0
      %883 = vmatprep.subr.mxu0 0.0
      %884 = vmatpush2.msra.mxu0 0.0
      %885 = vmatprep.subr.mxu0 0.0
      %886 = vmatpush2.msra.mxu0 0.0
      %887 = vmatprep.subr.mxu0 0.0
      %888 = vmatpush2.msra.mxu0 0.0
      %889 = vmatprep.subr.mxu0 0.0
      %890 = vmatpush2.msra.mxu0 0.0
      %891 = vmatprep.subr.mxu0 0.0
      %892 = vmatpush2.msra.mxu0 0.0
      %893 = vmatprep.mubr.f32.mxu0 0.0
      %894 = vmatmul.mubr.f32.gmra.mxu0 %v749
      %v895 = vpop.f32.mrf.mxu0
      %v896 = vadd.f32 0.0, %v895
      %v897 = vpop.f32.mrf.mxu0
      %898 = vmatprep.mubr.f32.mxu0 0.0
      %899 = vmatmul.mubr.f32.gmra.mxu0 %v752
      %v900 = vpop.f32.mrf.mxu0
      %v901 = vadd.f32 0.0, %v900
      %v902 = vpop.f32.mrf.mxu0
      %903 = vdwg.mxu0
      %905 = vset.pattern.permute.xlu0 0
      %906 = vperm.xlu0 %905, %v896
      %v907 = vpop.permute.xlu0 %906
      %910 = vset.pattern.permute.xlu0 0
      %911 = vperm.xlu0 %910, %v901
      %v912 = vpop.permute.xlu0 %911
      %v914 = vmul.f32 %v473, %v907
      %v915 = vmul.f32 %v474, %v912
      %v916 = vsub.f32 %v821, %v914
      %v917 = vsub.f32 %v826, %v915
      %v918 = vmul.f32 %v916, %v916
      %v919 = vmul.f32 %v917, %v917
      %v920 = vsel %vm291, %v918, 0.0
      %921 = vadd.xlane.f32.xlu0 %v920
      %v922 = vpop.xlane.xlu0 %921
      %v923 = vsel %vm683, %v919, 0.0
      %924 = vadd.xlane.f32.xlu0 %v923
      %v925 = vpop.xlane.xlu0 %924
      %v926 = vmax.f32 %v922, 1e-24
      %v927 = vmax.f32 %v925, 1e-24
      %v928 = vrsqrt.pop %v926
      %v929 = vrsqrt.pop %v927
      %v930 = vmul.f32 %v916, %v928
      %v931 = vmul.f32 %v917, %v929
      %v932 = vmul.f32 %v930, %v930
      %v933 = vmul.f32 %v931, %v931
      %v934 = vsel %vm291, %v932, 0.0
      %v935 = vsel %vm683, %v933, 0.0
      %v936 = vadd.f32 %v934, %v935
      %937 = vadd.xlane.f32.xlu0 %v936
      %v938 = vpop.xlane.xlu0 %937
      %v939 = vrot.slane %v938, 4
      %v940 = vadd.f32 %v938, %v939
      %v941 = vrot.slane %v940, 2
      %v942 = vadd.f32 %v940, %v941
      %v943 = vrot.slane %v942, 1
      %v944 = vadd.f32 %v942, %v943
      %s945 = vtos %v944
      %s946 = smax.f32 %s945, 1e-24
      %v947 = vstv %s946
      %v948 = vrsqrt.pop %v947
      %s949 = vtos %v948
      %v950 = vstv %s949
      %v951 = vmul.f32 %v930, %v950
      %v952 = vmul.f32 %v931, %v950
      %s953 = scalar_lea.vmem %s204, 16
      %954 = vst.msk [vmem:[%s953] sm:$0xff] %vm291, %v951
      %955 = vst.msk [vmem:[%s953 + $0x8] sm:$0x1f] %vm683, %v952
      %s956 = smul.u32 2, %s15
      %p957 = scmp.lt.s32.totalorder %s956, 3
      %s958 = scalar_select %p957, %s956, 3
      %s959 = smul.addr %s958, 2
      %s960 = smul.addr %s959, 8
      %s961 = scalar_lea.vmem %s4, %s960
      // Predicated region
      $region37: #{tpu_custom_call.1} parent=35 // pred_check
        %p962 = pneg %p122
      $region38: #{tpu_custom_call.1} parent=35 // pred_check_branch
        %964 = sbr.rel (%p962) target = $region40
      $region39: #{tpu_custom_call.1} parent=35 // pred_region
        %s965 = smul.u32 2, %s15
      $region40: #{tpu_custom_call.1} parent=35 // pred_fallthru
        _
    $region36: #{tpu_custom_call.1} parent=5 // pred_fallthru
      _
    %p966 = scmp.le.s32.totalorder 2, %s10
    // Predicated region
    $region41: #{tpu_custom_call.1} parent=5 // pred_check
      %p967 = pneg %p966
    $region42: #{tpu_custom_call.1} parent=5 // pred_check_branch
      %969 = sbr.rel (%p967) target = $region44
    $region43: #{tpu_custom_call.1} parent=5 // pred_region
      %s970 = ssub.s32 %s10, 2
      // Predicated region
      $region45: #{tpu_custom_call.1} parent=43 // pred_check
        %p971 = pneg %p128
      $region46: #{tpu_custom_call.1} parent=43 // pred_check_branch
        %973 = sbr.rel (%p971) target = $region48
      $region47: #{tpu_custom_call.1} parent=43 // pred_region
        %s974 = smul.u32 2, %s16
        %p975 = scmp.lt.s32.totalorder %s974, 3
        %s976 = scalar_select %p975, %s974, 3
        %s977 = smul.addr %s976, 2
        %s978 = smul.addr %s977, 8
        %s979 = scalar_lea.vmem %s4, %s978
      $region48: #{tpu_custom_call.1} parent=43 // pred_fallthru
        _
    $region44: #{tpu_custom_call.1} parent=5 // pred_fallthru
      _
  $region6: #{tpu_custom_call.1} parent=0 // loop_footer
    %s14 = sadd.s32 1, %s10
  $region7: #{tpu_custom_call.1} parent=0 // loop_footer_branch
    %9 = sbr.rel target = $region3
  $region8: #{tpu_custom_call.1} parent=0 // loop_exit
    _

</llo_original>
